<compile_context>
chip_gen: v7x
topology: tpu7x:2x2x1
jax: 0.10.0
libtpu: 0.0.40
codegen_flags: <defaults>
</compile_context>

<pallas_src>
import jax
import jax.numpy as jnp
from jax.experimental import pallas as pl
from jax.experimental.pallas import tpu as pltpu


def _batch_swap_noise_kernel(x_ref, shift_ref, o_ref):
    """One (B, TF) column strip: out[i, j] = x[(i + shift[i, j]) % B, j]."""
    B = x_ref.shape[0]
    x = x_ref[...]          # (B, TF), kept in the input dtype
    shift = shift_ref[...]  # (B, TF) int32 in [0, B)

    def body(s, carry):
        x_roll, acc = carry
        # After s steps: x_roll[i, :] == x[(i + s) % B, :]
        x_roll = jnp.roll(x_roll, -1, axis=0)
        acc = jnp.where(shift == s, x_roll, acc)
        return x_roll, acc

    # shift == 0 elements are covered by acc's initial value (= x).
    unroll = True if B <= 32 else 8
    _, acc = jax.lax.fori_loop(1, B, body, (x, x), unroll=unroll)
    o_ref[...] = acc


def _pick_feature_tile(F):
    # Largest lane-dense tile (multiple of 128 lanes) dividing F, capped at
    # 2048; fall back to the full feature dim (always a legal block size).
    for tf in (2048, 1024, 512, 256, 128):
        if F % tf == 0:
            return tf
    return F


def batch_swap_noise(x, key, swap_rate, *, training=True, feature_tile=None):
    """BatchSwapNoise forward. x: (B, F). Returns same shape/dtype."""
    if not training:
        return x
    B, F = x.shape

    # Random mask + row offset, distributionally equivalent to the torch code
    # (torch.rand > 1 - rate; floor(torch.rand * B)).  Bit-exact RNG match with
    # torch is not possible across frameworks.
    k_mask, k_row = jax.random.split(key)
    u_mask = jax.random.uniform(k_mask, (B, F), dtype=jnp.float32)
    l1 = jax.random.randint(k_row, (B, F), 0, B, dtype=jnp.int32)
    shift = jnp.where(u_mask > jnp.float32(1.0 - swap_rate), l1, 0).astype(jnp.int32)

    tf = _pick_feature_tile(F) if feature_tile is None else int(feature_tile)
    assert F % tf == 0, f"feature_tile {tf} must divide F={F}"

    return pl.pallas_call(
        _batch_swap_noise_kernel,
        out_shape=jax.ShapeDtypeStruct((B, F), x.dtype),
        grid=(F // tf,),
        in_specs=[
            pl.BlockSpec((B, tf), lambda j: (0, j)),
            pl.BlockSpec((B, tf), lambda j: (0, j)),
        ],
        out_specs=pl.BlockSpec((B, tf), lambda j: (0, j)),
        # x and the output have identical shape/dtype/blocking: alias them so
        # the op is done in place when the caller donates x under jit.
        input_output_aliases={0: 0},
        compiler_params=pltpu.CompilerParams(
            # Feature tiles are fully independent: let megacore split the grid.
            dimension_semantics=("parallel",),
            # NOTE: for very large (B, TF) blocks raise vmem_limit_bytes here
            # (v5e scoped default is 16 MiB, v6e/v7x 32 MiB).
        ),
    )(x, shift)


if __name__ == "__main__":
    import numpy as np

    root = jax.random.PRNGKey(0)
    k_x, k_noise = jax.random.split(root)

    B, F = 8, 256
    swap_rate = 0.25

    x = jax.random.normal(k_x, (B, F), dtype=jnp.float32)
    x_np = np.asarray(x)

    # Eval mode is identity.
    out_eval = jax.block_until_ready(
        batch_swap_noise(x, k_noise, swap_rate, training=False))
    assert np.array_equal(np.asarray(out_eval), x_np)

    # Training mode: feature_tile=128 -> grid of 2 lane-dense tiles.
    out = batch_swap_noise(x, k_noise, swap_rate, training=True, feature_tile=128)
    out = jax.block_until_ready(out)
    assert out.shape == x.shape and out.dtype == x.dtype
    out_np = np.asarray(out)

    # Values are only ever swapped within a column: every output element must
    # equal SOME input element from the same column.
    for j in range(F):
        col = set(x_np[:, j].tolist())
        assert all(v in col for v in out_np[:, j].tolist())

    # With swap_rate=0.25 some (but not all) elements should have changed.
    frac_changed = float(np.mean(out_np != x_np))
    assert 0.0 < frac_changed < 1.0, frac_changed

    print("KERNEL_OK")
</pallas_src>

<mosaic_0001>
module attributes {stable_mosaic.version = 11 : i64} {
  func.func @_batch_swap_noise_kernel(%arg0: i32, %arg1: memref<8x128xf32, #tpu.memory_space<vmem>>, %arg2: memref<8x128xi32, #tpu.memory_space<vmem>>, %arg3: memref<8x128xf32, #tpu.memory_space<vmem>>) attributes {dimension_semantics = [#tpu.dimension_semantics<parallel>], iteration_bounds = array<i64: 2>, scalar_prefetch = 0 : i64, scratch_operands = 0 : i64, tpu.core_type = #tpu.core_type<tc>, window_params = [{transform_indices = @transform_0, window_bounds = array<i64: 8, 128>}, {transform_indices = @transform_1, window_bounds = array<i64: 8, 128>}, {transform_indices = @transform_2, window_bounds = array<i64: 8, 128>}]} {
    %c0 = arith.constant 0 : index
    %c0_0 = arith.constant 0 : index
    %0 = vector.load %arg1[%c0, %c0_0] : memref<8x128xf32, #tpu.memory_space<vmem>>, vector<8x128xf32>
    %c0_1 = arith.constant 0 : index
    %c0_2 = arith.constant 0 : index
    %1 = vector.load %arg2[%c0_1, %c0_2] : memref<8x128xi32, #tpu.memory_space<vmem>>, vector<8x128xi32>
    %c1_i32 = arith.constant 1 : i32
    %2 = vector.extract_strided_slice %0 {offsets = [1, 0], sizes = [7, 128], strides = [1, 1]} : vector<8x128xf32> to vector<7x128xf32>
    %3 = vector.extract_strided_slice %0 {offsets = [0, 0], sizes = [1, 128], strides = [1, 1]} : vector<8x128xf32> to vector<1x128xf32>
    %4 = tpu.concatenate %2, %3 in 0 : vector<7x128xf32>, vector<1x128xf32> -> vector<8x128xf32>
    %5 = vector.broadcast %c1_i32 : i32 to vector<8x128xi32>
    %6 = arith.cmpi eq, %1, %5 : vector<8x128xi32>
    %7 = arith.select %6, %4, %0 : vector<8x128xi1>, vector<8x128xf32>
    %c2_i32 = arith.constant 2 : i32
    %8 = vector.extract_strided_slice %4 {offsets = [1, 0], sizes = [7, 128], strides = [1, 1]} : vector<8x128xf32> to vector<7x128xf32>
    %9 = vector.extract_strided_slice %4 {offsets = [0, 0], sizes = [1, 128], strides = [1, 1]} : vector<8x128xf32> to vector<1x128xf32>
    %10 = tpu.concatenate %8, %9 in 0 : vector<7x128xf32>, vector<1x128xf32> -> vector<8x128xf32>
    %11 = vector.broadcast %c2_i32 : i32 to vector<8x128xi32>
    %12 = arith.cmpi eq, %1, %11 : vector<8x128xi32>
    %13 = arith.select %12, %10, %7 : vector<8x128xi1>, vector<8x128xf32>
    %c3_i32 = arith.constant 3 : i32
    %14 = vector.extract_strided_slice %10 {offsets = [1, 0], sizes = [7, 128], strides = [1, 1]} : vector<8x128xf32> to vector<7x128xf32>
    %15 = vector.extract_strided_slice %10 {offsets = [0, 0], sizes = [1, 128], strides = [1, 1]} : vector<8x128xf32> to vector<1x128xf32>
    %16 = tpu.concatenate %14, %15 in 0 : vector<7x128xf32>, vector<1x128xf32> -> vector<8x128xf32>
    %17 = vector.broadcast %c3_i32 : i32 to vector<8x128xi32>
    %18 = arith.cmpi eq, %1, %17 : vector<8x128xi32>
    %19 = arith.select %18, %16, %13 : vector<8x128xi1>, vector<8x128xf32>
    %c4_i32 = arith.constant 4 : i32
    %20 = vector.extract_strided_slice %16 {offsets = [1, 0], sizes = [7, 128], strides = [1, 1]} : vector<8x128xf32> to vector<7x128xf32>
    %21 = vector.extract_strided_slice %16 {offsets = [0, 0], sizes = [1, 128], strides = [1, 1]} : vector<8x128xf32> to vector<1x128xf32>
    %22 = tpu.concatenate %20, %21 in 0 : vector<7x128xf32>, vector<1x128xf32> -> vector<8x128xf32>
    %23 = vector.broadcast %c4_i32 : i32 to vector<8x128xi32>
    %24 = arith.cmpi eq, %1, %23 : vector<8x128xi32>
    %25 = arith.select %24, %22, %19 : vector<8x128xi1>, vector<8x128xf32>
    %c5_i32 = arith.constant 5 : i32
    %26 = vector.extract_strided_slice %22 {offsets = [1, 0], sizes = [7, 128], strides = [1, 1]} : vector<8x128xf32> to vector<7x128xf32>
    %27 = vector.extract_strided_slice %22 {offsets = [0, 0], sizes = [1, 128], strides = [1, 1]} : vector<8x128xf32> to vector<1x128xf32>
    %28 = tpu.concatenate %26, %27 in 0 : vector<7x128xf32>, vector<1x128xf32> -> vector<8x128xf32>
    %29 = vector.broadcast %c5_i32 : i32 to vector<8x128xi32>
    %30 = arith.cmpi eq, %1, %29 : vector<8x128xi32>
    %31 = arith.select %30, %28, %25 : vector<8x128xi1>, vector<8x128xf32>
    %c6_i32 = arith.constant 6 : i32
    %32 = vector.extract_strided_slice %28 {offsets = [1, 0], sizes = [7, 128], strides = [1, 1]} : vector<8x128xf32> to vector<7x128xf32>
    %33 = vector.extract_strided_slice %28 {offsets = [0, 0], sizes = [1, 128], strides = [1, 1]} : vector<8x128xf32> to vector<1x128xf32>
    %34 = tpu.concatenate %32, %33 in 0 : vector<7x128xf32>, vector<1x128xf32> -> vector<8x128xf32>
    %35 = vector.broadcast %c6_i32 : i32 to vector<8x128xi32>
    %36 = arith.cmpi eq, %1, %35 : vector<8x128xi32>
    %37 = arith.select %36, %34, %31 : vector<8x128xi1>, vector<8x128xf32>
    %c7_i32 = arith.constant 7 : i32
    %38 = vector.extract_strided_slice %34 {offsets = [1, 0], sizes = [7, 128], strides = [1, 1]} : vector<8x128xf32> to vector<7x128xf32>
    %39 = vector.extract_strided_slice %34 {offsets = [0, 0], sizes = [1, 128], strides = [1, 1]} : vector<8x128xf32> to vector<1x128xf32>
    %40 = tpu.concatenate %38, %39 in 0 : vector<7x128xf32>, vector<1x128xf32> -> vector<8x128xf32>
    %41 = vector.broadcast %c7_i32 : i32 to vector<8x128xi32>
    %42 = arith.cmpi eq, %1, %41 : vector<8x128xi32>
    %43 = arith.select %42, %40, %37 : vector<8x128xi1>, vector<8x128xf32>
    %c7_i32_3 = arith.constant 7 : i32
    %c0_4 = arith.constant 0 : index
    %c0_5 = arith.constant 0 : index
    %44 = vector.load %arg3[%c0_4, %c0_5] : memref<8x128xf32, #tpu.memory_space<vmem>>, vector<8x128xf32>
    tpu.vector_store %arg3[%c0_4, %c0_5], %43 {strides = array<i32>} : memref<8x128xf32, #tpu.memory_space<vmem>>, vector<8x128xf32>,
    return
  }
  func.func @transform_0(%arg0: i32) -> (i32, i32) {
    %c0_i32 = arith.constant 0 : i32
    %c0_i32_0 = arith.constant 0 : i32
    return %c0_i32, %arg0 : i32, i32
  }
  func.func @transform_1(%arg0: i32) -> (i32, i32) {
    %c0_i32 = arith.constant 0 : i32
    %c0_i32_0 = arith.constant 0 : i32
    return %c0_i32, %arg0 : i32, i32
  }
  func.func @transform_2(%arg0: i32) -> (i32, i32) {
    %c0_i32 = arith.constant 0 : i32
    %c0_i32_0 = arith.constant 0 : i32
    return %c0_i32, %arg0 : i32, i32
  }
}

</mosaic_0001>

<llo_original>
// kernel: tpu_custom_call.1
$region0: #{tpu_custom_call.1}
  #allocation0 [shape = 'u32[]', space=smem, size = 0x4, offset = 0x4, fixed_abs, tag = 'smem constant byte address 0x4 - core index']
  #allocation1 [shape = 'u32[144,128]{1,0:T(1,128)}', space=vmem, size = 0x12000, scoped, tag = 'internal scratch']
  %s0 = inlined_call_operand.hbm [shape: f32[8,256], index: 0, kind: input, shape index: {}, may-alias: {0,2}]
  %s1 = inlined_call_operand.vmem [shape: s32[8,256], index: 1, kind: input, shape index: {}]
  %s2 = inlined_call_operand.hbm [shape: f32[8,256], index: 2, kind: output, shape index: {}, may-alias: {0,2}]
  %s3 = sld [smem:[#allocation0]]
  $region45: #{tpu_custom_call.1} parent=0
    _
  %s5 = ssub.s32 1, %s3
  %s6 = scalar_select 0, %s5, %s3
  $region1: #{tpu_custom_call.1} parent=0
    #allocation2 [shape = 'u8[8192]{0}', space=vmem, size = 0x2000, scoped, tag = 'input window, operand 0']
    #allocation3 [shape = 's32[2]{0}', space=sflag, size = 0x8, scoped, tag = 'scoped memory for tpu_custom_call.1']
    #allocation4 [shape = 's32[2]{0}', space=sflag, size = 0x8, scoped, tag = 'scoped memory for tpu_custom_call.1']
    #allocation5 [shape = 'u8[8192]{0}', space=vmem, size = 0x2000, scoped, tag = 'output window, operand 0']
    %7 = vsyncpa [#allocation3], 0
    %s8 = scalar_lea.sflag [#allocation3], 1
    %9 = vsyncpa %s8, 0
    %10 = vsyncpa [#allocation4], 0
    %s11 = scalar_lea.sflag [#allocation4], 1
    %12 = vsyncpa %s11, 0
    loop: start=0, step=1, limit=4
    $region2: #{tpu_custom_call.1} parent=1 // loop_pre_header
      _
    $region3: #{tpu_custom_call.1} parent=1 // loop_header
      %s14 = sphi 0, %s18
      %p15 = scmp.ge.s32.totalorder %s14, 4
      %s24 = sphi 0, %s26
      %s27 = sphi 0, %s24
      %s28 = sphi 0, %s27
      %s44 = sphi 0, %s28
      %s50 = sphi 0, %s52
      %s53 = sphi 0, %s50
      %s54 = sphi 0, %s53
      %s70 = sphi 0, %s54
      %s76 = sphi 0, %s78
      %s79 = sphi 0, %s76
      %s80 = sphi 0, %s79
      %s96 = sphi 0, %s80
    $region4: #{tpu_custom_call.1} parent=1 // loop_header_branch
      %17 = sbr.rel (%p15) target = $region8
    $region5: #{tpu_custom_call.1} parent=1 // loop_body
      %s19 = ssub.s32 %s14, 1
      %s20 = ssub.s32 %s14, 2
      %s21 = sadd.s32 %s14, 1
      %s22 = ssub.s32 %s14, %s21
      %p23 = scmp.eq.s32.totalorder %s22, 0
      %s25 = sadd.s32 %s24, 1
      %s26 = scalar_select %p23, %s24, %s25
      %p29 = pneg %p23
      %p30 = scmp.eq.s32.totalorder %s14, 1
      %p31 = por %p29, %p30
      %p32 = scmp.ne.s32.totalorder %s24, %s27
      %p33 = scmp.eq.s32.totalorder %s14, 0
      %p34 = por %p32, %p33
      %p35 = scmp.ne.s32.totalorder %s24, %s27
      %p36 = scmp.eq.s32.totalorder %s19, 1
      %p37 = por %p35, %p36
      %p38 = scmp.ne.s32.totalorder %s27, %s28
      %p39 = scmp.eq.s32.totalorder %s19, 0
      %p40 = por %p38, %p39
      %p41 = scmp.ne.s32.totalorder %s27, %s28
      %p42 = scmp.eq.s32.totalorder %s20, 1
      %p43 = por %p41, %p42
      %p45 = scmp.ne.s32.totalorder %s28, %s44
      %p46 = scmp.eq.s32.totalorder %s20, 0
      %p47 = por %p45, %p46
      %s48 = ssub.s32 %s14, %s21
      %p49 = scmp.eq.s32.totalorder %s48, 0
      %s51 = sadd.s32 %s50, 1
      %s52 = scalar_select %p49, %s50, %s51
      %p55 = pneg %p49
      %p56 = scmp.eq.s32.totalorder %s14, 1
      %p57 = por %p55, %p56
      %p58 = scmp.ne.s32.totalorder %s50, %s53
      %p59 = scmp.eq.s32.totalorder %s14, 0
      %p60 = por %p58, %p59
      %p61 = scmp.ne.s32.totalorder %s50, %s53
      %p62 = scmp.eq.s32.totalorder %s19, 1
      %p63 = por %p61, %p62
      %p64 = scmp.ne.s32.totalorder %s53, %s54
      %p65 = scmp.eq.s32.totalorder %s19, 0
      %p66 = por %p64, %p65
      %p67 = scmp.ne.s32.totalorder %s53, %s54
      %p68 = scmp.eq.s32.totalorder %s20, 1
      %p69 = por %p67, %p68
      %p71 = scmp.ne.s32.totalorder %s54, %s70
      %p72 = scmp.eq.s32.totalorder %s20, 0
      %p73 = por %p71, %p72
      %s74 = ssub.s32 %s14, %s21
      %p75 = scmp.eq.s32.totalorder %s74, 0
      %s77 = sadd.s32 %s76, 1
      %s78 = scalar_select %p75, %s76, %s77
      %p81 = pneg %p75
      %p82 = scmp.eq.s32.totalorder %s14, 1
      %p83 = por %p81, %p82
      %p84 = scmp.ne.s32.totalorder %s76, %s79
      %p85 = scmp.eq.s32.totalorder %s14, 0
      %p86 = por %p84, %p85
      %p87 = scmp.ne.s32.totalorder %s76, %s79
      %p88 = scmp.eq.s32.totalorder %s19, 1
      %p89 = por %p87, %p88
      %p90 = scmp.ne.s32.totalorder %s79, %s80
      %p91 = scmp.eq.s32.totalorder %s19, 0
      %p92 = por %p90, %p91
      %p93 = scmp.ne.s32.totalorder %s79, %s80
      %p94 = scmp.eq.s32.totalorder %s20, 1
      %p95 = por %p93, %p94
      %p97 = scmp.ne.s32.totalorder %s80, %s96
      %p98 = scmp.eq.s32.totalorder %s20, 0
      %p99 = por %p97, %p98
      %p100 = scmp.le.s32.totalorder 1, %s14
      %p101 = scmp.lt.s32.totalorder %s14, 3
      %p102 = pnand %p100, %p101
      %p103 = pneg %p102
      // Predicated region
      $region9: #{tpu_custom_call.1} parent=5 // pred_check
        _
      $region10: #{tpu_custom_call.1} parent=5 // pred_check_branch
        %105 = sbr.rel (%p102) target = $region12
      $region11: #{tpu_custom_call.1} parent=5 // pred_region
        %s106 = ssub.s32 %s14, 1
      $region12: #{tpu_custom_call.1} parent=5 // pred_fallthru
        _
      %p107 = scmp.lt.s32.totalorder %s14, 2
      // Predicated region
      $region13: #{tpu_custom_call.1} parent=5 // pred_check
        %p108 = pneg %p107
      $region14: #{tpu_custom_call.1} parent=5 // pred_check_branch
        %110 = sbr.rel (%p108) target = $region16
      $region15: #{tpu_custom_call.1} parent=5 // pred_region
        // Predicated region
        $region17: #{tpu_custom_call.1} parent=15 // pred_check
          %p111 = pneg %p34
        $region18: #{tpu_custom_call.1} parent=15 // pred_check_branch
          %113 = sbr.rel (%p111) target = $region20
        $region19: #{tpu_custom_call.1} parent=15 // pred_region
          %s114 = sand.u32 %s24, 1
          %s115 = scalar_lea.sflag [#allocation3], %s114
          %s116 = sand.u32 %s24, 1
          %s117 = smul.addr %s116, 8
          %s118 = scalar_lea.vmem [#allocation2], %s117
          %s120 = ssub.s32 128, 128
          %121 = vsyncadd %s115, %s120
          %s122 = smul.addr %s14, 128
          %s123 = scalar_lea.hbm %s0, %s122
          %s125 = sshll.u32 %s118, 4
          %s126 = int_to_ptr.vmem [resolvable:$true] %s125
          %128 = dma.hbm_to_vmem [thread:$0]  %s123, 128, %s126, %s115
        $region20: #{tpu_custom_call.1} parent=15 // pred_fallthru
          _
        // Predicated region
        $region21: #{tpu_custom_call.1} parent=15 // pred_check
          %p129 = pneg %p60
        $region22: #{tpu_custom_call.1} parent=15 // pred_check_branch
          %131 = sbr.rel (%p129) target = $region24
        $region23: #{tpu_custom_call.1} parent=15 // pred_region
          %p132 = scmp.lt.s32.totalorder %s14, 1
          %s133 = scalar_select %p132, %s14, 1
          %s134 = smul.addr %s133, 8
          %s135 = scalar_lea.vmem %s1, %s134
        $region24: #{tpu_custom_call.1} parent=15 // pred_fallthru
          _
      $region16: #{tpu_custom_call.1} parent=5 // pred_fallthru
        _
      %p136 = scmp.le.s32.totalorder 1, %s14
      %p137 = scmp.lt.s32.totalorder %s14, 3
      %p138 = pnand %p136, %p137
      %p139 = pneg %p138
      // Predicated region
      $region25: #{tpu_custom_call.1} parent=5 // pred_check
        _
      $region26: #{tpu_custom_call.1} parent=5 // pred_check_branch
        %141 = sbr.rel (%p138) target = $region28
      $region27: #{tpu_custom_call.1} parent=5 // pred_region
        %s142 = ssub.s32 %s14, 1
        %s143 = sand.u32 %s27, 1
        %s144 = scalar_lea.sflag [#allocation3], %s143
        %s145 = sand.u32 %s27, 1
        %s146 = smul.addr %s145, 8
        %s147 = scalar_lea.vmem [#allocation2], %s146
        // Predicated region
        $region29: #{tpu_custom_call.1} parent=27 // pred_check
          %p148 = pneg %p40
        $region30: #{tpu_custom_call.1} parent=27 // pred_check_branch
          %150 = sbr.rel (%p148) target = $region32
        $region31: #{tpu_custom_call.1} parent=27 // pred_region
          %151 = dma.done %s144, 128
        $region32: #{tpu_custom_call.1} parent=27 // pred_fallthru
          _
        %s152 = sand.u32 %s27, 1
        %s153 = scalar_lea.sflag [#allocation3], %s152
        %s154 = sand.u32 %s27, 1
        %s155 = smul.addr %s154, 8
        %s156 = scalar_lea.vmem [#allocation2], %s155
        %p157 = pneg %p40
        %p158 = pneg %p37
        %p159 = scmp.lt.s32.totalorder %s19, 1
        %s160 = scalar_select %p159, %s19, 1
        %s161 = smul.addr %s160, 8
        %s162 = scalar_lea.vmem %s1, %s161
        %p163 = pneg %p66
        %p164 = pneg %p63
        %p165 = pneg %p92
        %p166 = pneg %p89
        %s167 = sand.u32 %s79, 1
        %s168 = scalar_lea.sflag [#allocation4], %s167
        %s169 = sand.u32 %s79, 1
        %s170 = smul.addr %s169, 8
        %s171 = scalar_lea.vmem [#allocation5], %s170
        %p172 = scmp.lt.s32.totalorder %s19, 1
        %s173 = scalar_select %p172, %s19, 1
        %s174 = smul.addr %s173, 8
        %s175 = scalar_lea.vmem %s1, %s174
        %v176 = vld [vmem:[%s147] sm:$0xff]
        %v177 = vld [vmem:[%s175] sm:$0xff]
        %v179 = vrot.slane %v176, 1
        %vm181 = vcmask 1046528
        %v182 = vsel %vm181, %v179, %v179
        %vm183 = vcmp.eq.s32.totalorder %v177, 1
        %v184 = vsel %vm183, %v182, %v176
        %v186 = vrot.slane %v182, 1
        %v188 = vsel %vm181, %v186, %v186
        %vm189 = vcmp.eq.s32.totalorder %v177, 2
        %v190 = vsel %vm189, %v188, %v184
        %v192 = vrot.slane %v188, 1
        %v194 = vsel %vm181, %v192, %v192
        %vm195 = vcmp.eq.s32.totalorder %v177, 3
        %v196 = vsel %vm195, %v194, %v190
        %v198 = vrot.slane %v194, 1
        %v200 = vsel %vm181, %v198, %v198
        %vm201 = vcmp.eq.s32.totalorder %v177, 4
        %v202 = vsel %vm201, %v200, %v196
        %v204 = vrot.slane %v200, 1
        %v206 = vsel %vm181, %v204, %v204
        %vm207 = vcmp.eq.s32.totalorder %v177, 5
        %v208 = vsel %vm207, %v206, %v202
        %v210 = vrot.slane %v206, 1
        %v212 = vsel %vm181, %v210, %v210
        %vm213 = vcmp.eq.s32.totalorder %v177, 6
        %v214 = vsel %vm213, %v212, %v208
        %v216 = vrot.slane %v212, 1
        %v218 = vsel %vm181, %v216, %v216
        %vm219 = vcmp.eq.s32.totalorder %v177, 7
        %v220 = vsel %vm219, %v218, %v214
        %221 = vst [vmem:[%s171] sm:$0xff] %v220
        %s222 = sand.u32 %s79, 1
        %s223 = scalar_lea.sflag [#allocation4], %s222
        %s224 = sand.u32 %s79, 1
        %s225 = smul.addr %s224, 8
        %s226 = scalar_lea.vmem [#allocation5], %s225
        // Predicated region
        $region33: #{tpu_custom_call.1} parent=27 // pred_check
          %p227 = pneg %p89
        $region34: #{tpu_custom_call.1} parent=27 // pred_check_branch
          %229 = sbr.rel (%p227) target = $region36
        $region35: #{tpu_custom_call.1} parent=27 // pred_region
          %s231 = ssub.s32 128, 128
          %232 = vsyncadd %s223, %s231
          %s233 = smul.addr %s19, 128
          %s234 = scalar_lea.hbm %s2, %s233
          %s236 = sshll.u32 %s226, 4
          %s237 = int_to_ptr.vmem [resolvable:$true] %s236
          %239 = dma.vmem_to_hbm [thread:$0]  %s237, 128, %s234, %s223
        $region36: #{tpu_custom_call.1} parent=27 // pred_fallthru
          _
      $region28: #{tpu_custom_call.1} parent=5 // pred_fallthru
        _
      %p240 = scmp.le.s32.totalorder 2, %s14
      // Predicated region
      $region37: #{tpu_custom_call.1} parent=5 // pred_check
        %p241 = pneg %p240
      $region38: #{tpu_custom_call.1} parent=5 // pred_check_branch
        %243 = sbr.rel (%p241) target = $region40
      $region39: #{tpu_custom_call.1} parent=5 // pred_region
        %s244 = ssub.s32 %s14, 2
        // Predicated region
        $region41: #{tpu_custom_call.1} parent=39 // pred_check
          %p245 = pneg %p95
        $region42: #{tpu_custom_call.1} parent=39 // pred_check_branch
          %247 = sbr.rel (%p245) target = $region44
        $region43: #{tpu_custom_call.1} parent=39 // pred_region
          %s248 = sand.u32 %s80, 1
          %s249 = scalar_lea.sflag [#allocation4], %s248
          %s250 = sand.u32 %s80, 1
          %s251 = smul.addr %s250, 8
          %s252 = scalar_lea.vmem [#allocation5], %s251
          %253 = dma.done %s249, 128
        $region44: #{tpu_custom_call.1} parent=39 // pred_fallthru
          _
      $region40: #{tpu_custom_call.1} parent=5 // pred_fallthru
        _
    $region6: #{tpu_custom_call.1} parent=1 // loop_footer
      %s18 = sadd.s32 1, %s14
    $region7: #{tpu_custom_call.1} parent=1 // loop_footer_branch
      %13 = sbr.rel target = $region3
    $region8: #{tpu_custom_call.1} parent=1 // loop_exit
      _
    %254 = vsyncpa [#allocation3], 1
    %s255 = scalar_lea.sflag [#allocation3], 1
    %256 = vsyncpa %s255, 1
    %257 = vsyncpa [#allocation4], 1
    %s258 = scalar_lea.sflag [#allocation4], 1
    %259 = vsyncpa %s258, 1

</llo_original>
